<compile_context>
chip_gen: v7x
topology: tpu7x:2x2x1
jax: 0.10.0
libtpu: 0.0.40
codegen_flags: <defaults>
</compile_context>

<pallas_src>
import functools
import math

import jax
import jax.numpy as jnp
from jax.experimental import pallas as pl
from jax.experimental.pallas import tpu as pltpu

_VMEM_CAP_BYTES = 48 << 20  # safe across v5e/v6e (128 MiB VMEM) and v7x (64 MiB/TC)


def _round_up(x, m):
    return ((x + m - 1) // m) * m


def _cdiv(a, b):
    return (a + b - 1) // b


def _pick_tile_r(n_rows, requested, row_align, row_cap):
    """Row tile: as large as VMEM allows, but keep >=2 grid steps (v7x has two
    TensorCores / pipeline overlap) and aim for ~4 steps when rows permit."""
    cap = max(row_align, min(int(requested), int(row_cap)))
    cap = (cap // row_align) * row_align
    t = min(cap, _round_up(n_rows, row_align))
    for target_steps, min_rows in ((4, 256), (2, row_align)):
        if _cdiv(n_rows, t) < target_steps:
            cand = min(cap, _round_up(_cdiv(n_rows, target_steps), row_align))
            if cand >= min_rows:
                t = cand
    return max(row_align, t)


def _aggregator_kernel(x_ref, w_ref, b_ref, o_ref, *, n_models, hidden_size, d_out):
    """One row-tile of the aggregator.

    x_ref: (n_models, tile_r, d_in)      streamed input tile (compute dtype)
    w_ref: (n_models, d_in, d_out + h)   fused [value | key] projections
                                         (model 0's key part == the query layer)
    b_ref: (n_models, 1, d_out + h)      fused biases, f32
    o_ref: (tile_r, d_out)
    """
    scale = 1.0 / math.sqrt(hidden_size)

    # Target model: one fused matmul gives both v0 (lanes [0, d_out)) and the
    # query (lanes [d_out, d_out+h)); reuse_target_query_as_key=True -> k_0 == q.
    kv0 = jnp.dot(x_ref[0], w_ref[0], preferred_element_type=jnp.float32) + b_ref[0]
    q = kv0[:, d_out:]
    acc = kv0[:, :d_out]                                         # exp(s0 - s0) * v0
    m_run = jnp.sum(q * q, axis=-1, keepdims=True) * scale       # running max
    den = jnp.ones_like(m_run)                                   # exp(s0 - s0)

    # Remaining models: one fused [V|K] matmul each + online softmax update
    # (static unroll, n_models is small; keeps only acc/den/m_run live).
    for mi in range(1, n_models):
        kv = jnp.dot(x_ref[mi], w_ref[mi],
                     preferred_element_type=jnp.float32) + b_ref[mi]
        s = jnp.sum(q * kv[:, d_out:], axis=-1, keepdims=True) * scale
        m_new = jnp.maximum(m_run, s)
        alpha = jnp.exp(m_run - m_new)
        e = jnp.exp(s - m_new)
        den = alpha * den + e
        acc = alpha * acc + e * kv[:, :d_out]
        m_run = m_new

    inv = pl.reciprocal(den, approx=True)       # EUP slot
    inv = inv * (2.0 - den * inv)               # one Newton step -> ~f32 accuracy
    o_ref[...] = (acc * inv).astype(o_ref.dtype)


def attention_based_aggregator(x_stack, wq, bq, wk, bk, wv, bv, *,
                               tile_r=512, compute_dtype=jnp.bfloat16):
    """Forward of AttentionBasedAggregator (default config).

    x_stack: (n_models, R, d_in), R = batch * num_tokens (any R; rows are padded).
    wq:(d_in,h) bq:(1,h) wk:(n_models,d_in,h) bk:(n_models,1,h)
    wv:(n_models,d_in,d_out) bv:(n_models,1,d_out)
    wk[0]/bk[0] are ignored: the target key shares the query layer by construction.
    Returns (R, d_out).
    """
    n_models, R, d_in = x_stack.shape
    h = wq.shape[1]
    d_out = wv.shape[2]
    assert n_models >= 1
    assert wk.shape == (n_models, d_in, h) and wv.shape == (n_models, d_in, d_out)

    out_dtype = x_stack.dtype
    compute_dtype = jnp.dtype(compute_dtype)
    cbytes = compute_dtype.itemsize
    obytes = jnp.dtype(out_dtype).itemsize
    fused = h + d_out

    # Fused per-model [value | key] projection weights; model 0's key part is the
    # shared query layer (reuse_target_query_as_key=True). V first keeps the value
    # slice lane-aligned at offset 0; q and k share the same lane offset.
    k_w = jnp.concatenate([wq[None], wk[1:]], axis=0)            # (n_models, d_in, h)
    k_b = jnp.concatenate([bq[None], bk[1:]], axis=0)            # (n_models, 1, h)
    w_fused = jnp.concatenate([wv, k_w], axis=-1).astype(compute_dtype)
    b_fused = jnp.concatenate([bv, k_b], axis=-1).astype(jnp.float32)

    # Sublane packing: 8 rows per vreg for 4-byte dtypes, 16 for 2-byte (bf16).
    row_align = max(8, 32 // cbytes, 32 // obytes)

    # VMEM working set: double-buffered x/out stream + (conservatively 2x) weights.
    w_bytes = 2 * n_models * fused * (d_in * cbytes + 4)
    per_row = 2 * (n_models * d_in * cbytes + d_out * obytes)
    budget = _VMEM_CAP_BYTES - w_bytes - (6 << 20)
    row_cap = max(row_align, budget // per_row) if budget > 0 else row_align

    tile_r = _pick_tile_r(R, tile_r, row_align, row_cap)
    r_pad = _round_up(R, tile_r)

    x_p = x_stack
    if r_pad != R:
        x_p = jnp.pad(x_p, ((0, 0), (0, r_pad - R), (0, 0)))
    x_p = x_p.astype(compute_dtype)

    vmem_limit = int(min(max(w_bytes + per_row * tile_r + (6 << 20), 24 << 20),
                         _VMEM_CAP_BYTES))

    kernel = functools.partial(_aggregator_kernel, n_models=n_models,
                               hidden_size=h, d_out=d_out)

    out = pl.pallas_call(
        kernel,
        out_shape=jax.ShapeDtypeStruct((r_pad, d_out), out_dtype),
        grid_spec=pltpu.PrefetchScalarGridSpec(
            num_scalar_prefetch=0,
            grid=(r_pad // tile_r,),
            in_specs=[
                pl.BlockSpec((n_models, tile_r, d_in), lambda i: (0, i, 0)),
                pl.BlockSpec((n_models, d_in, fused), lambda i: (0, 0, 0)),
                pl.BlockSpec((n_models, 1, fused), lambda i: (0, 0, 0)),
            ],
            out_specs=pl.BlockSpec((tile_r, d_out), lambda i: (i, 0)),
        ),
        compiler_params=pltpu.CompilerParams(
            dimension_semantics=("parallel",),
            vmem_limit_bytes=vmem_limit,
        ),
    )(x_p, w_fused, b_fused)

    return out[:R] if r_pad != R else out


def _reference(x_stack, wq, bq, wk, bk, wv, bv):
    """Pure-JAX replica of the PyTorch forward (token2token, query_idx=0)."""
    n_models = x_stack.shape[0]
    h = wq.shape[1]
    hp = jax.lax.Precision.HIGHEST
    q = jnp.dot(x_stack[0], wq, precision=hp) + bq                                  # (R, H)
    keys = jnp.stack([jnp.dot(x_stack[m], wk[m], precision=hp) + bk[m, 0]
                      for m in range(n_models)], axis=-1)                           # (R, H, M)
    vals = jnp.stack([jnp.dot(x_stack[m], wv[m], precision=hp) + bv[m, 0]
                      for m in range(n_models)], axis=-1)                           # (R, D, M)
    scores = jnp.einsum('rh,rhm->rm', q, keys, precision=hp) / math.sqrt(h)         # (R, M)
    w = jax.nn.softmax(scores, axis=-1)
    return jnp.einsum('rm,rdm->rd', w, vals, precision=hp)                          # (R, D)


if __name__ == "__main__":
    model_ids = ["model_a", "model_b", "model_c"]
    n_models = len(model_ids)
    batch, num_tokens = 2, 8
    input_size, hidden_size = 32, 16
    output_size = input_size  # output_size=None -> input_size

    key = jax.random.PRNGKey(0)
    k_x, k_wq, k_bq, k_wk, k_bk, k_wv, k_bv = jax.random.split(key, 7)

    # dict of model outputs -> stacked (n_models, B*T, input_size)
    x_dict = {
        mid: jax.random.normal(jax.random.fold_in(k_x, i),
                               (batch, num_tokens, input_size), dtype=jnp.float32)
        for i, mid in enumerate(model_ids)
    }
    x_stack = jnp.stack([v.reshape(batch * num_tokens, input_size)
                         for v in x_dict.values()], axis=0)

    # Deterministic synthetic parameters (nn.Linear shapes, right-multiply layout).
    wq = jax.random.normal(k_wq, (input_size, hidden_size), jnp.float32) * 0.1
    bq = jax.random.normal(k_bq, (1, hidden_size), jnp.float32) * 0.1
    wk = jax.random.normal(k_wk, (n_models, input_size, hidden_size), jnp.float32) * 0.1
    bk = jax.random.normal(k_bk, (n_models, 1, hidden_size), jnp.float32) * 0.1
    # reuse_target_query_as_key=True -> keys[query_idx] shares the query layer
    wk = wk.at[0].set(wq)
    bk = bk.at[0, 0].set(bq[0])
    wv = jax.random.normal(k_wv, (n_models, input_size, output_size), jnp.float32) * 0.1
    bv = jax.random.normal(k_bv, (n_models, 1, output_size), jnp.float32) * 0.1

    ref = _reference(x_stack, wq, bq, wk, bk, wv, bv)

    # Default path: bf16 streaming / MXU, f32 accumulate + f32 softmax.
    out_bf16 = attention_based_aggregator(x_stack, wq, bq, wk, bk, wv, bv)
    jax.block_until_ready(out_bf16)
    assert out_bf16.shape == (batch * num_tokens, output_size)
    assert jnp.allclose(out_bf16, ref, atol=5e-2, rtol=5e-2), "bf16 mismatch vs reference"

    # f32 path (tight tolerance; exercises a 2-step row grid even at this tiny size).
    out_f32 = attention_based_aggregator(x_stack, wq, bq, wk, bk, wv, bv,
                                         compute_dtype=jnp.float32)
    jax.block_until_ready(out_f32)
    assert jnp.allclose(out_f32, ref, atol=1e-3, rtol=1e-3), "f32 mismatch vs reference"

    # Ragged row count -> exercises row padding and a multi-tile grid.
    R2 = 15
    x2 = jax.random.normal(jax.random.fold_in(k_x, 99),
                           (n_models, R2, input_size), jnp.float32)
    out2 = attention_based_aggregator(x2, wq, bq, wk, bk, wv, bv,
                                      tile_r=8, compute_dtype=jnp.float32)
    jax.block_until_ready(out2)
    ref2 = _reference(x2, wq, bq, wk, bk, wv, bv)
    assert jnp.allclose(out2, ref2, atol=1e-3, rtol=1e-3), "padded-grid mismatch vs reference"

    out = out_bf16.reshape(batch, num_tokens, output_size)
    jax.block_until_ready(out)
    print("KERNEL_OK")
</pallas_src>

<mosaic_0001>
module attributes {stable_mosaic.version = 11 : i64} {
  func.func @_aggregator_kernel(%arg0: i32, %arg1: memref<3x16x32xbf16, #tpu.memory_space<vmem>>, %arg2: memref<3x32x48xbf16, #tpu.memory_space<vmem>>, %arg3: memref<3x1x48xf32, #tpu.memory_space<vmem>>, %arg4: memref<16x32xf32, #tpu.memory_space<vmem>>) attributes {dimension_semantics = [#tpu.dimension_semantics<parallel>], iteration_bounds = array<i64: 1>, scalar_prefetch = 0 : i64, scratch_operands = 0 : i64, tpu.core_type = #tpu.core_type<tc>, window_params = [{transform_indices = @transform_0, window_bounds = array<i64: 3, 16, 32>}, {pipeline_mode = #tpu.pipeline_mode<synchronous>, transform_indices = @transform_1, window_bounds = array<i64: 3, 32, 48>}, {pipeline_mode = #tpu.pipeline_mode<synchronous>, transform_indices = @transform_2, window_bounds = array<i64: 3, 1, 48>}, {transform_indices = @transform_3, window_bounds = array<i64: 16, 32>}]} {
    %c0 = arith.constant 0 : index
    %c0_0 = arith.constant 0 : index
    %c0_1 = arith.constant 0 : index
    %0 = vector.load %arg1[%c0, %c0_0, %c0_1] : memref<3x16x32xbf16, #tpu.memory_space<vmem>>, vector<1x16x32xbf16>
    %1 = vector.shape_cast %0 : vector<1x16x32xbf16> to vector<16x32xbf16>
    %c0_2 = arith.constant 0 : index
    %c0_3 = arith.constant 0 : index
    %c0_4 = arith.constant 0 : index
    %2 = vector.load %arg2[%c0_2, %c0_3, %c0_4] : memref<3x32x48xbf16, #tpu.memory_space<vmem>>, vector<1x32x48xbf16>
    %3 = vector.shape_cast %2 : vector<1x32x48xbf16> to vector<32x48xbf16>
    %cst = arith.constant dense<0.000000e+00> : vector<16x48xf32>
    %4 = tpu.matmul %1, %3, %cst {dimension_numbers = #tpu.dot_dimension_numbers<[1], [0], [0], [1], [0, 0, 1, 1], [], []>} : vector<16x32xbf16>, vector<32x48xbf16>, vector<16x48xf32> -> vector<16x48xf32>
    %c0_5 = arith.constant 0 : index
    %c0_6 = arith.constant 0 : index
    %c0_7 = arith.constant 0 : index
    %5 = vector.load %arg3[%c0_5, %c0_6, %c0_7] : memref<3x1x48xf32, #tpu.memory_space<vmem>>, vector<1x1x48xf32>
    %6 = vector.shape_cast %5 : vector<1x1x48xf32> to vector<1x48xf32>
    %7 = vector.broadcast %6 : vector<1x48xf32> to vector<16x48xf32>
    %8 = arith.addf %4, %7 : vector<16x48xf32>
    %9 = vector.extract_strided_slice %8 {offsets = [0, 32], sizes = [16, 16], strides = [1, 1]} : vector<16x48xf32> to vector<16x16xf32>
    %10 = vector.extract_strided_slice %8 {offsets = [0, 0], sizes = [16, 32], strides = [1, 1]} : vector<16x48xf32> to vector<16x32xf32>
    %11 = arith.mulf %9, %9 : vector<16x16xf32>
    %cst_8 = arith.constant dense<0.000000e+00> : vector<16xf32>
    %12 = vector.multi_reduction <add>, %11, %cst_8 [1] : vector<16x16xf32> to vector<16xf32>
    %13 = vector.shape_cast %12 : vector<16xf32> to vector<16x1xf32>
    %cst_9 = arith.constant 2.500000e-01 : f32
    %14 = vector.broadcast %cst_9 : f32 to vector<16x1xf32>
    %15 = arith.mulf %13, %14 : vector<16x1xf32>
    %cst_10 = arith.constant 1.000000e+00 : f32
    %16 = vector.broadcast %cst_10 : f32 to vector<16x1xf32>
    %c1 = arith.constant 1 : index
    %c0_11 = arith.constant 0 : index
    %c0_12 = arith.constant 0 : index
    %17 = vector.load %arg1[%c1, %c0_11, %c0_12] : memref<3x16x32xbf16, #tpu.memory_space<vmem>>, vector<1x16x32xbf16>
    %18 = vector.shape_cast %17 : vector<1x16x32xbf16> to vector<16x32xbf16>
    %c1_13 = arith.constant 1 : index
    %c0_14 = arith.constant 0 : index
    %c0_15 = arith.constant 0 : index
    %19 = vector.load %arg2[%c1_13, %c0_14, %c0_15] : memref<3x32x48xbf16, #tpu.memory_space<vmem>>, vector<1x32x48xbf16>
    %20 = vector.shape_cast %19 : vector<1x32x48xbf16> to vector<32x48xbf16>
    %cst_16 = arith.constant dense<0.000000e+00> : vector<16x48xf32>
    %21 = tpu.matmul %18, %20, %cst_16 {dimension_numbers = #tpu.dot_dimension_numbers<[1], [0], [0], [1], [0, 0, 1, 1], [], []>} : vector<16x32xbf16>, vector<32x48xbf16>, vector<16x48xf32> -> vector<16x48xf32>
    %c1_17 = arith.constant 1 : index
    %c0_18 = arith.constant 0 : index
    %c0_19 = arith.constant 0 : index
    %22 = vector.load %arg3[%c1_17, %c0_18, %c0_19] : memref<3x1x48xf32, #tpu.memory_space<vmem>>, vector<1x1x48xf32>
    %23 = vector.shape_cast %22 : vector<1x1x48xf32> to vector<1x48xf32>
    %24 = vector.broadcast %23 : vector<1x48xf32> to vector<16x48xf32>
    %25 = arith.addf %21, %24 : vector<16x48xf32>
    %26 = vector.extract_strided_slice %25 {offsets = [0, 32], sizes = [16, 16], strides = [1, 1]} : vector<16x48xf32> to vector<16x16xf32>
    %27 = arith.mulf %9, %26 : vector<16x16xf32>
    %cst_20 = arith.constant dense<0.000000e+00> : vector<16xf32>
    %28 = vector.multi_reduction <add>, %27, %cst_20 [1] : vector<16x16xf32> to vector<16xf32>
    %29 = vector.shape_cast %28 : vector<16xf32> to vector<16x1xf32>
    %cst_21 = arith.constant 2.500000e-01 : f32
    %30 = vector.broadcast %cst_21 : f32 to vector<16x1xf32>
    %31 = arith.mulf %29, %30 : vector<16x1xf32>
    %32 = arith.maximumf %15, %31 : vector<16x1xf32>
    %33 = arith.subf %15, %32 : vector<16x1xf32>
    %34 = math.exp %33 : vector<16x1xf32>
    %35 = arith.subf %31, %32 : vector<16x1xf32>
    %36 = math.exp %35 : vector<16x1xf32>
    %37 = arith.mulf %34, %16 : vector<16x1xf32>
    %38 = arith.addf %37, %36 : vector<16x1xf32>
    %39 = vector.broadcast %34 : vector<16x1xf32> to vector<16x32xf32>
    %40 = arith.mulf %39, %10 : vector<16x32xf32>
    %41 = vector.extract_strided_slice %25 {offsets = [0, 0], sizes = [16, 32], strides = [1, 1]} : vector<16x48xf32> to vector<16x32xf32>
    %42 = vector.broadcast %36 : vector<16x1xf32> to vector<16x32xf32>
    %43 = arith.mulf %42, %41 : vector<16x32xf32>
    %44 = arith.addf %40, %43 : vector<16x32xf32>
    %c2 = arith.constant 2 : index
    %c0_22 = arith.constant 0 : index
    %c0_23 = arith.constant 0 : index
    %45 = vector.load %arg1[%c2, %c0_22, %c0_23] : memref<3x16x32xbf16, #tpu.memory_space<vmem>>, vector<1x16x32xbf16>
    %46 = vector.shape_cast %45 : vector<1x16x32xbf16> to vector<16x32xbf16>
    %c2_24 = arith.constant 2 : index
    %c0_25 = arith.constant 0 : index
    %c0_26 = arith.constant 0 : index
    %47 = vector.load %arg2[%c2_24, %c0_25, %c0_26] : memref<3x32x48xbf16, #tpu.memory_space<vmem>>, vector<1x32x48xbf16>
    %48 = vector.shape_cast %47 : vector<1x32x48xbf16> to vector<32x48xbf16>
    %cst_27 = arith.constant dense<0.000000e+00> : vector<16x48xf32>
    %49 = tpu.matmul %46, %48, %cst_27 {dimension_numbers = #tpu.dot_dimension_numbers<[1], [0], [0], [1], [0, 0, 1, 1], [], []>} : vector<16x32xbf16>, vector<32x48xbf16>, vector<16x48xf32> -> vector<16x48xf32>
    %c2_28 = arith.constant 2 : index
    %c0_29 = arith.constant 0 : index
    %c0_30 = arith.constant 0 : index
    %50 = vector.load %arg3[%c2_28, %c0_29, %c0_30] : memref<3x1x48xf32, #tpu.memory_space<vmem>>, vector<1x1x48xf32>
    %51 = vector.shape_cast %50 : vector<1x1x48xf32> to vector<1x48xf32>
    %52 = vector.broadcast %51 : vector<1x48xf32> to vector<16x48xf32>
    %53 = arith.addf %49, %52 : vector<16x48xf32>
    %54 = vector.extract_strided_slice %53 {offsets = [0, 32], sizes = [16, 16], strides = [1, 1]} : vector<16x48xf32> to vector<16x16xf32>
    %55 = arith.mulf %9, %54 : vector<16x16xf32>
    %cst_31 = arith.constant dense<0.000000e+00> : vector<16xf32>
    %56 = vector.multi_reduction <add>, %55, %cst_31 [1] : vector<16x16xf32> to vector<16xf32>
    %57 = vector.shape_cast %56 : vector<16xf32> to vector<16x1xf32>
    %cst_32 = arith.constant 2.500000e-01 : f32
    %58 = vector.broadcast %cst_32 : f32 to vector<16x1xf32>
    %59 = arith.mulf %57, %58 : vector<16x1xf32>
    %60 = arith.maximumf %32, %59 : vector<16x1xf32>
    %61 = arith.subf %32, %60 : vector<16x1xf32>
    %62 = math.exp %61 : vector<16x1xf32>
    %63 = arith.subf %59, %60 : vector<16x1xf32>
    %64 = math.exp %63 : vector<16x1xf32>
    %65 = arith.mulf %62, %38 : vector<16x1xf32>
    %66 = arith.addf %65, %64 : vector<16x1xf32>
    %67 = vector.broadcast %62 : vector<16x1xf32> to vector<16x32xf32>
    %68 = arith.mulf %67, %44 : vector<16x32xf32>
    %69 = vector.extract_strided_slice %53 {offsets = [0, 0], sizes = [16, 32], strides = [1, 1]} : vector<16x48xf32> to vector<16x32xf32>
    %70 = vector.broadcast %64 : vector<16x1xf32> to vector<16x32xf32>
    %71 = arith.mulf %70, %69 : vector<16x32xf32>
    %72 = arith.addf %68, %71 : vector<16x32xf32>
    %73 = tpu.reciprocal %66 {approx = true} : vector<16x1xf32> -> vector<16x1xf32>
    %74 = arith.mulf %66, %73 : vector<16x1xf32>
    %cst_33 = arith.constant 2.000000e+00 : f32
    %75 = vector.broadcast %cst_33 : f32 to vector<16x1xf32>
    %76 = arith.subf %75, %74 : vector<16x1xf32>
    %77 = arith.mulf %73, %76 : vector<16x1xf32>
    %78 = vector.broadcast %77 : vector<16x1xf32> to vector<16x32xf32>
    %79 = arith.mulf %72, %78 : vector<16x32xf32>
    %c0_34 = arith.constant 0 : index
    %c0_35 = arith.constant 0 : index
    %80 = vector.load %arg4[%c0_34, %c0_35] : memref<16x32xf32, #tpu.memory_space<vmem>>, vector<16x32xf32>
    tpu.vector_store %arg4[%c0_34, %c0_35], %79 {strides = array<i32>} : memref<16x32xf32, #tpu.memory_space<vmem>>, vector<16x32xf32>,
    return
  }
  func.func @transform_0(%arg0: i32) -> (i32, i32, i32) {
    %c0_i32 = arith.constant 0 : i32
    %c0_i32_0 = arith.constant 0 : i32
    %c0_i32_1 = arith.constant 0 : i32
    return %c0_i32, %arg0, %c0_i32_0 : i32, i32, i32
  }
  func.func @transform_1(%arg0: i32) -> (i32, i32, i32) {
    %c0_i32 = arith.constant 0 : i32
    %c0_i32_0 = arith.constant 0 : i32
    %c0_i32_1 = arith.constant 0 : i32
    %c0_i32_2 = arith.constant 0 : i32
    return %c0_i32, %c0_i32_0, %c0_i32_1 : i32, i32, i32
  }
  func.func @transform_2(%arg0: i32) -> (i32, i32, i32) {
    %c0_i32 = arith.constant 0 : i32
    %c0_i32_0 = arith.constant 0 : i32
    %c0_i32_1 = arith.constant 0 : i32
    %c0_i32_2 = arith.constant 0 : i32
    return %c0_i32, %c0_i32_0, %c0_i32_1 : i32, i32, i32
  }
  func.func @transform_3(%arg0: i32) -> (i32, i32) {
    %c0_i32 = arith.constant 0 : i32
    %c0_i32_0 = arith.constant 0 : i32
    return %arg0, %c0_i32 : i32, i32
  }
}

</mosaic_0001>

<llo_original>
// kernel: tpu_custom_call.1
$region0: #{tpu_custom_call.1}
  #allocation0 [shape = 'u32[]', space=smem, size = 0x4, offset = 0x4, fixed_abs, tag = 'smem constant byte address 0x4 - core index']
  #allocation1 [shape = 'u32[144,128]{1,0:T(1,128)}', space=vmem, size = 0x12000, scoped, tag = 'internal scratch']
  %s0 = inlined_call_operand.hbm [shape: bf16[3,16,32], index: 0, kind: input, shape index: {}]
  %s1 = inlined_call_operand.hbm [shape: bf16[3,32,48], index: 1, kind: input, shape index: {}]
  %s2 = inlined_call_operand.vmem [shape: f32[3,1,48], index: 2, kind: input, shape index: {}]
  %s3 = inlined_call_operand.hbm [shape: f32[16,32], index: 3, kind: output, shape index: {}]
  %s4 = sld [smem:[#allocation0]]
  $region30: #{tpu_custom_call.1} parent=0
    _
  %s6 = ssub.s32 1, %s4
  %s7 = scalar_select 0, %s6, %s4
  $region1: #{tpu_custom_call.1} parent=0
    #allocation2 [shape = 'u8[12288]{0}', space=vmem, size = 0x3000, scoped, tag = 'input window, operand 0, single buffered']
    #allocation3 [shape = 's32[1]{0}', space=sflag, size = 0x4, scoped, tag = 'scoped memory for tpu_custom_call.1']
    #allocation4 [shape = 's32[1]{0}', space=sflag, size = 0x4, scoped, tag = 'scoped memory for tpu_custom_call.1']
    #allocation5 [shape = 'u8[24576]{0}', space=vmem, size = 0x6000, scoped, tag = 'input window, operand 1, single buffered']
    #allocation6 [shape = 's32[1]{0}', space=sflag, size = 0x4, scoped, tag = 'scoped memory for tpu_custom_call.1']
    #allocation7 [shape = 'u8[8192]{0}', space=vmem, size = 0x2000, scoped, tag = 'output window, operand 0, single buffered']
    %8 = vsyncpa [#allocation3], 0
    %9 = vsyncpa [#allocation6], 0
    %10 = vsyncpa [#allocation4], 0
    // Predicated region
    $region2: #{tpu_custom_call.1} parent=1 // pred_check
      _
    $region3: #{tpu_custom_call.1} parent=1 // pred_check_branch
      %12 = sbr.rel (0) target = $region5
    $region4: #{tpu_custom_call.1} parent=1 // pred_region
      %s14 = ssub.s32 384, 384
      %15 = vsyncadd [#allocation3], %s14
      %s16 = sshll.u32 [#allocation2], 4
      %s17 = int_to_ptr.vmem [resolvable:$true] %s16
      %22 = dma.hbm_to_vmem [thread:$0]  %s0, 384, %s17, [#allocation3], 64, 64, 4
    $region5: #{tpu_custom_call.1} parent=1 // pred_fallthru
      _
    // Predicated region
    $region6: #{tpu_custom_call.1} parent=1 // pred_check
      _
    $region7: #{tpu_custom_call.1} parent=1 // pred_check_branch
      %24 = sbr.rel (0) target = $region9
    $region8: #{tpu_custom_call.1} parent=1 // pred_region
      %s26 = ssub.s32 768, 768
      %27 = vsyncadd [#allocation6], %s26
      %s28 = sshll.u32 [#allocation5], 4
      %s29 = int_to_ptr.vmem [resolvable:$true] %s28
      %34 = dma.hbm_to_vmem [thread:$0]  %s1, 768, %s29, [#allocation6], 64, 64, 4
    $region9: #{tpu_custom_call.1} parent=1 // pred_fallthru
      _
    // Predicated region
    $region10: #{tpu_custom_call.1} parent=1 // pred_check
      _
    $region11: #{tpu_custom_call.1} parent=1 // pred_check_branch
      %36 = sbr.rel (0) target = $region13
    $region12: #{tpu_custom_call.1} parent=1 // pred_region
      _
    $region13: #{tpu_custom_call.1} parent=1 // pred_fallthru
      _
    // Predicated region
    $region14: #{tpu_custom_call.1} parent=1 // pred_check
      _
    $region15: #{tpu_custom_call.1} parent=1 // pred_check_branch
      %38 = sbr.rel (0) target = $region17
    $region16: #{tpu_custom_call.1} parent=1 // pred_region
      %39 = dma.done [#allocation3], 384
    $region17: #{tpu_custom_call.1} parent=1 // pred_fallthru
      _
    // Predicated region
    $region18: #{tpu_custom_call.1} parent=1 // pred_check
      _
    $region19: #{tpu_custom_call.1} parent=1 // pred_check_branch
      %41 = sbr.rel (0) target = $region21
    $region20: #{tpu_custom_call.1} parent=1 // pred_region
      %42 = dma.done [#allocation6], 768
    $region21: #{tpu_custom_call.1} parent=1 // pred_fallthru
      _
    %v44 = vld [vmem:[#allocation2] sm:$0xf]
    %v45 = vld [vmem:[#allocation2 + $0x4] sm:$0xf]
    %v46 = vld [vmem:[#allocation5] sm:$0xf]
    %v47 = vld [vmem:[#allocation5 + $0x4] sm:$0xf]
    %v48 = vld [vmem:[#allocation5 + $0x8] sm:$0xf]
    %v49 = vld [vmem:[#allocation5 + $0xc] sm:$0xf]
    %v50 = vld [vmem:[%s2] sm:$0x1]
    %v52 = vlaneseq
    %v53 = vshrl.u32 %v52, 7
    %v54 = vsub.s32 0, %v53
    %v55 = vrot.slane %v50, %v54
    %v59 = vunpack.c.l.b16 %v44
    %v60 = vunpack.c.l.b16 %v45
    %v61 = vpack.c.b16 %v60, %v59
    %v66 = vunpack.c.l.b16 %v46
    %v67 = vunpack.c.l.b16 %v47
    %v68 = vunpack.c.l.b16 %v48
    %v69 = vunpack.c.l.b16 %v49
    %v70 = vpack.c.b16 %v67, %v66
    %v71 = vpack.c.b16 %v69, %v68
    %vm74 = vcmask 261120
    %v76 = vsel %vm74, %v61, 0
    %78 = vmatprep.subr.bf16.mxu0 0
    %79 = vmatpush1.bf16.msra.mxu0 %v70
    %80 = vmatprep.subr.bf16.mxu0 0
    %81 = vmatpush1.bf16.msra.mxu0 %v71
    %82 = vmatprep.subr.bf16.mxu0 0
    %83 = vmatpush1.bf16.msra.mxu0 0
    %84 = vmatprep.subr.bf16.mxu0 0
    %85 = vmatpush1.bf16.msra.mxu0 0
    %86 = vmatprep.subr.bf16.mxu0 0
    %87 = vmatpush1.bf16.msra.mxu0 0
    %88 = vmatprep.subr.bf16.mxu0 0
    %89 = vmatpush1.bf16.msra.mxu0 0
    %90 = vmatprep.subr.bf16.mxu0 0
    %91 = vmatpush1.bf16.msra.mxu0 0
    %92 = vmatprep.subr.bf16.mxu0 0
    %93 = vmatpush1.bf16.msra.mxu0 0
    %94 = vmatprep.subr.bf16.mxu0 0
    %95 = vmatpush1.bf16.msra.mxu0 0
    %96 = vmatprep.subr.bf16.mxu0 0
    %97 = vmatpush1.bf16.msra.mxu0 0
    %98 = vmatprep.subr.bf16.mxu0 0
    %99 = vmatpush1.bf16.msra.mxu0 0
    %100 = vmatprep.subr.bf16.mxu0 0
    %101 = vmatpush1.bf16.msra.mxu0 0
    %102 = vmatprep.subr.bf16.mxu0 0
    %103 = vmatpush1.bf16.msra.mxu0 0
    %104 = vmatprep.subr.bf16.mxu0 0
    %105 = vmatpush1.bf16.msra.mxu0 0
    %106 = vmatprep.subr.bf16.mxu0 0
    %107 = vmatpush1.bf16.msra.mxu0 0
    %108 = vmatprep.subr.bf16.mxu0 0
    %109 = vmatpush1.bf16.msra.mxu0 0
    %110 = vmatprep.mubr.bf16.mxu0 0
    %111 = vmatmul.mubr.bf16.gmra.mrb[0].mxu0 %v76
    %v112 = vpop.f32.mrb[0].mxu0
    %v113 = vadd.f32 %v55, %v112
    %v114 = vpop.f32.mrb[0].mxu0
    %v115 = vpop.f32.mrb[0].mxu0
    %v116 = vadd.f32 %v55, %v115
    %v117 = vpop.f32.mrb[0].mxu0
    %118 = vdwg.mxu0
    %v119 = vmul.f32 %v113, %v113
    %v120 = vmul.f32 %v116, %v116
    %123 = vrot.lane.b32.xlu0 %v119, 96
    %v124 = vpop.permute.xlu0 %123
    %125 = vrot.lane.b32.xlu0 %v120, 96
    %v126 = vpop.permute.xlu0 %125
    %vm129 = vcmask 130048
    %v130 = vsel %vm129, %v124, 0.0
    %131 = vadd.xlane.f32.xlu0 %v130
    %v132 = vpop.xlane.xlu0 %131
    %v133 = vsel %vm129, %v126, 0.0
    %134 = vadd.xlane.f32.xlu0 %v133
    %v135 = vpop.xlane.xlu0 %134
    %v136 = vmul.f32 %v132, 0.25
    %v137 = vmul.f32 %v135, 0.25
    %s138 = scalar_lea.vmem [#allocation2], 8
    %v139 = vld [vmem:[%s138] sm:$0xf]
    %v140 = vld [vmem:[%s138 + $0x4] sm:$0xf]
    %s141 = scalar_lea.vmem [#allocation5], 16
    %v142 = vld [vmem:[%s141] sm:$0xf]
    %v143 = vld [vmem:[%s141 + $0x4] sm:$0xf]
    %v144 = vld [vmem:[%s141 + $0x8] sm:$0xf]
    %v145 = vld [vmem:[%s141 + $0xc] sm:$0xf]
    %s146 = scalar_lea.vmem %s2, 1
    %v147 = vld [vmem:[%s146] sm:$0x1]
    %v149 = vlaneseq
    %v150 = vshrl.u32 %v149, 7
    %v151 = vsub.s32 0, %v150
    %v152 = vrot.slane %v147, %v151
    %v156 = vunpack.c.l.b16 %v139
    %v157 = vunpack.c.l.b16 %v140
    %v158 = vpack.c.b16 %v157, %v156
    %v163 = vunpack.c.l.b16 %v142
    %v164 = vunpack.c.l.b16 %v143
    %v165 = vunpack.c.l.b16 %v144
    %v166 = vunpack.c.l.b16 %v145
    %v167 = vpack.c.b16 %v164, %v163
    %v168 = vpack.c.b16 %v166, %v165
    %v172 = vsel %vm74, %v158, 0
    %174 = vmatprep.subr.bf16.mxu0 0
    %175 = vmatpush1.bf16.msra.mxu0 %v167
    %176 = vmatprep.subr.bf16.mxu0 0
    %177 = vmatpush1.bf16.msra.mxu0 %v168
    %178 = vmatprep.subr.bf16.mxu0 0
    %179 = vmatpush1.bf16.msra.mxu0 0
    %180 = vmatprep.subr.bf16.mxu0 0
    %181 = vmatpush1.bf16.msra.mxu0 0
    %182 = vmatprep.subr.bf16.mxu0 0
    %183 = vmatpush1.bf16.msra.mxu0 0
    %184 = vmatprep.subr.bf16.mxu0 0
    %185 = vmatpush1.bf16.msra.mxu0 0
    %186 = vmatprep.subr.bf16.mxu0 0
    %187 = vmatpush1.bf16.msra.mxu0 0
    %188 = vmatprep.subr.bf16.mxu0 0
    %189 = vmatpush1.bf16.msra.mxu0 0
    %190 = vmatprep.subr.bf16.mxu0 0
    %191 = vmatpush1.bf16.msra.mxu0 0
    %192 = vmatprep.subr.bf16.mxu0 0
    %193 = vmatpush1.bf16.msra.mxu0 0
    %194 = vmatprep.subr.bf16.mxu0 0
    %195 = vmatpush1.bf16.msra.mxu0 0
    %196 = vmatprep.subr.bf16.mxu0 0
    %197 = vmatpush1.bf16.msra.mxu0 0
    %198 = vmatprep.subr.bf16.mxu0 0
    %199 = vmatpush1.bf16.msra.mxu0 0
    %200 = vmatprep.subr.bf16.mxu0 0
    %201 = vmatpush1.bf16.msra.mxu0 0
    %202 = vmatprep.subr.bf16.mxu0 0
    %203 = vmatpush1.bf16.msra.mxu0 0
    %204 = vmatprep.subr.bf16.mxu0 0
    %205 = vmatpush1.bf16.msra.mxu0 0
    %206 = vmatprep.mubr.bf16.mxu0 0
    %207 = vmatmul.mubr.bf16.gmra.mrb[0].mxu0 %v172
    %v208 = vpop.f32.mrb[0].mxu0
    %v209 = vadd.f32 %v152, %v208
    %v210 = vpop.f32.mrb[0].mxu0
    %v211 = vpop.f32.mrb[0].mxu0
    %v212 = vadd.f32 %v152, %v211
    %v213 = vpop.f32.mrb[0].mxu0
    %214 = vdwg.mxu0
    %v215 = vmul.f32 %v113, %v209
    %v216 = vmul.f32 %v116, %v212
    %219 = vrot.lane.b32.xlu0 %v215, 96
    %v220 = vpop.permute.xlu0 %219
    %221 = vrot.lane.b32.xlu0 %v216, 96
    %v222 = vpop.permute.xlu0 %221
    %v225 = vsel %vm129, %v220, 0.0
    %226 = vadd.xlane.f32.xlu0 %v225
    %v227 = vpop.xlane.xlu0 %226
    %v228 = vsel %vm129, %v222, 0.0
    %229 = vadd.xlane.f32.xlu0 %v228
    %v230 = vpop.xlane.xlu0 %229
    %v231 = vmul.f32 %v227, 0.25
    %v232 = vmul.f32 %v230, 0.25
    %v233 = vmax.f32 %v136, %v231
    %v234 = vmax.f32 %v137, %v232
    %v235 = vsub.f32 %v136, %v233
    %v236 = vsub.f32 %v137, %v234
    %v237 = vmul.f32 %v235, 1.442695
    %v238 = vpow.pop %v237
    %v239 = vmul.f32 %v236, 1.442695
    %v240 = vpow.pop %v239
    %v241 = vsub.f32 %v231, %v233
    %v242 = vsub.f32 %v232, %v234
    %v243 = vmul.f32 %v241, 1.442695
    %v244 = vpow.pop %v243
    %v245 = vmul.f32 %v242, 1.442695
    %v246 = vpow.pop %v245
    %v247 = vadd.f32 %v238, %v244
    %v248 = vadd.f32 %v240, %v246
    %v249 = vmul.f32 %v238, %v113
    %v250 = vmul.f32 %v240, %v116
    %v251 = vmul.f32 %v244, %v209
    %v252 = vmul.f32 %v246, %v212
    %v253 = vadd.f32 %v249, %v251
    %v254 = vadd.f32 %v250, %v252
    %s255 = scalar_lea.vmem [#allocation2], 16
    %v256 = vld [vmem:[%s255] sm:$0xf]
    %v257 = vld [vmem:[%s255 + $0x4] sm:$0xf]
    %s258 = scalar_lea.vmem [#allocation5], 32
    %v259 = vld [vmem:[%s258] sm:$0xf]
    %v260 = vld [vmem:[%s258 + $0x4] sm:$0xf]
    %v261 = vld [vmem:[%s258 + $0x8] sm:$0xf]
    %v262 = vld [vmem:[%s258 + $0xc] sm:$0xf]
    %s263 = scalar_lea.vmem %s2, 2
    %v264 = vld [vmem:[%s263] sm:$0x1]
    %v266 = vlaneseq
    %v267 = vshrl.u32 %v266, 7
    %v268 = vsub.s32 0, %v267
    %v269 = vrot.slane %v264, %v268
    %v273 = vunpack.c.l.b16 %v256
    %v274 = vunpack.c.l.b16 %v257
    %v275 = vpack.c.b16 %v274, %v273
    %v280 = vunpack.c.l.b16 %v259
    %v281 = vunpack.c.l.b16 %v260
    %v282 = vunpack.c.l.b16 %v261
    %v283 = vunpack.c.l.b16 %v262
    %v284 = vpack.c.b16 %v281, %v280
    %v285 = vpack.c.b16 %v283, %v282
    %v289 = vsel %vm74, %v275, 0
    %291 = vmatprep.subr.bf16.mxu0 0
    %292 = vmatpush1.bf16.msra.mxu0 %v284
    %293 = vmatprep.subr.bf16.mxu0 0
    %294 = vmatpush1.bf16.msra.mxu0 %v285
    %295 = vmatprep.subr.bf16.mxu0 0
    %296 = vmatpush1.bf16.msra.mxu0 0
    %297 = vmatprep.subr.bf16.mxu0 0
    %298 = vmatpush1.bf16.msra.mxu0 0
    %299 = vmatprep.subr.bf16.mxu0 0
    %300 = vmatpush1.bf16.msra.mxu0 0
    %301 = vmatprep.subr.bf16.mxu0 0
    %302 = vmatpush1.bf16.msra.mxu0 0
    %303 = vmatprep.subr.bf16.mxu0 0
    %304 = vmatpush1.bf16.msra.mxu0 0
    %305 = vmatprep.subr.bf16.mxu0 0
    %306 = vmatpush1.bf16.msra.mxu0 0
    %307 = vmatprep.subr.bf16.mxu0 0
    %308 = vmatpush1.bf16.msra.mxu0 0
    %309 = vmatprep.subr.bf16.mxu0 0
    %310 = vmatpush1.bf16.msra.mxu0 0
    %311 = vmatprep.subr.bf16.mxu0 0
    %312 = vmatpush1.bf16.msra.mxu0 0
    %313 = vmatprep.subr.bf16.mxu0 0
    %314 = vmatpush1.bf16.msra.mxu0 0
    %315 = vmatprep.subr.bf16.mxu0 0
    %316 = vmatpush1.bf16.msra.mxu0 0
    %317 = vmatprep.subr.bf16.mxu0 0
    %318 = vmatpush1.bf16.msra.mxu0 0
    %319 = vmatprep.subr.bf16.mxu0 0
    %320 = vmatpush1.bf16.msra.mxu0 0
    %321 = vmatprep.subr.bf16.mxu0 0
    %322 = vmatpush1.bf16.msra.mxu0 0
    %323 = vmatprep.mubr.bf16.mxu0 0
    %324 = vmatmul.mubr.bf16.gmra.mrb[0].mxu0 %v289
    %v325 = vpop.f32.mrb[0].mxu0
    %v326 = vadd.f32 %v269, %v325
    %v327 = vpop.f32.mrb[0].mxu0
    %v328 = vpop.f32.mrb[0].mxu0
    %v329 = vadd.f32 %v269, %v328
    %v330 = vpop.f32.mrb[0].mxu0
    %331 = vdwg.mxu0
    %v332 = vmul.f32 %v113, %v326
    %v333 = vmul.f32 %v116, %v329
    %336 = vrot.lane.b32.xlu0 %v332, 96
    %v337 = vpop.permute.xlu0 %336
    %338 = vrot.lane.b32.xlu0 %v333, 96
    %v339 = vpop.permute.xlu0 %338
    %v342 = vsel %vm129, %v337, 0.0
    %343 = vadd.xlane.f32.xlu0 %v342
    %v344 = vpop.xlane.xlu0 %343
    %v345 = vsel %vm129, %v339, 0.0
    %346 = vadd.xlane.f32.xlu0 %v345
    %v347 = vpop.xlane.xlu0 %346
    %v348 = vmul.f32 %v344, 0.25
    %v349 = vmul.f32 %v347, 0.25
    %v350 = vmax.f32 %v233, %v348
    %v351 = vmax.f32 %v234, %v349
    %v352 = vsub.f32 %v233, %v350
    %v353 = vsub.f32 %v234, %v351
    %v354 = vmul.f32 %v352, 1.442695
    %v355 = vpow.pop %v354
    %v356 = vmul.f32 %v353, 1.442695
    %v357 = vpow.pop %v356
    %v358 = vsub.f32 %v348, %v350
    %v359 = vsub.f32 %v349, %v351
    %v360 = vmul.f32 %v358, 1.442695
    %v361 = vpow.pop %v360
    %v362 = vmul.f32 %v359, 1.442695
    %v363 = vpow.pop %v362
    %v364 = vmul.f32 %v355, %v247
    %v365 = vmul.f32 %v357, %v248
    %v366 = vadd.f32 %v364, %v361
    %v367 = vadd.f32 %v365, %v363
    %v368 = vmul.f32 %v355, %v253
    %v369 = vmul.f32 %v357, %v254
    %v370 = vmul.f32 %v361, %v326
    %v371 = vmul.f32 %v363, %v329
    %v372 = vadd.f32 %v368, %v370
    %v373 = vadd.f32 %v369, %v371
    %v374 = vrcp.pop %v366
    %v375 = vrcp.pop %v367
    %v376 = vmul.f32 %v366, %v374
    %v377 = vmul.f32 %v367, %v375
    %v378 = vsub.f32 2.0, %v376
    %v379 = vsub.f32 2.0, %v377
    %v380 = vmul.f32 %v374, %v378
    %v381 = vmul.f32 %v375, %v379
    %v382 = vmul.f32 %v372, %v380
    %v383 = vmul.f32 %v373, %v381
    %384 = vst.msk [vmem:[#allocation7] sm:$0xff] %vm74, %v382
    %385 = vst.msk [vmem:[#allocation7 + $0x8] sm:$0xff] %vm74, %v383
    // Predicated region
    $region22: #{tpu_custom_call.1} parent=1 // pred_check
      _
    $region23: #{tpu_custom_call.1} parent=1 // pred_check_branch
      %387 = sbr.rel (0) target = $region25
    $region24: #{tpu_custom_call.1} parent=1 // pred_region
      %s389 = ssub.s32 256, 256
      %390 = vsyncadd [#allocation4], %s389
      %s391 = sshll.u32 [#allocation7], 4
      %s392 = int_to_ptr.vmem [resolvable:$true] %s391
      %397 = dma.vmem_to_hbm [thread:$0]  %s392, 256, %s3, [#allocation4], 128, 128, 8
    $region25: #{tpu_custom_call.1} parent=1 // pred_fallthru
      _
    // Predicated region
    $region26: #{tpu_custom_call.1} parent=1 // pred_check
      _
    $region27: #{tpu_custom_call.1} parent=1 // pred_check_branch
      %399 = sbr.rel (0) target = $region29
    $region28: #{tpu_custom_call.1} parent=1 // pred_region
      %400 = dma.done [#allocation4], 256
    $region29: #{tpu_custom_call.1} parent=1 // pred_fallthru
      _
    %401 = vsyncpa [#allocation3], 1
    %402 = vsyncpa [#allocation6], 1
    %403 = vsyncpa [#allocation4], 1

</llo_original>
